<compile_context>
chip_gen: v5e
topology: v5e:2x2
jax: 0.10.0
libtpu: 0.0.40
codegen_flags: <defaults>
</compile_context>

<pallas_src>
import math
import functools

import jax
import jax.numpy as jnp
from jax import lax
from jax.experimental import pallas as pl
from jax.experimental.pallas import tpu as pltpu


# ------------------------------ tiling helpers ------------------------------

def _choose_tile(dim, preferred, align):
    """Largest tile <= preferred that divides `dim` and is `align`-aligned.
    Falls back to the full dim (untiled axis) if no such tile exists."""
    if dim <= preferred:
        return dim
    start = (preferred // align) * align
    for cand in range(start, 0, -align):
        if dim % cand == 0:
            return cand
    return dim


# 32 MiB scoped VMEM request: safe on v5e/v6e (128 MiB physical) and leaves
# headroom on v7x (64 MiB physical).  Tile choices below stay well under this
# with double-buffered inputs.
_VMEM_LIMIT = 32 * 1024 * 1024


# -------------------------- tiled linear projection --------------------------

def _linear_kernel(x_ref, w_ref, o_ref, acc_ref):
    # x: (tm, tk); w: (tn, tk) — native nn.Linear (out, in) layout.
    @pl.when(pl.program_id(2) == 0)
    def _():
        acc_ref[...] = jnp.zeros_like(acc_ref)

    # Contract K of both operands directly; no transposed weight copy in HBM.
    acc_ref[...] += lax.dot_general(
        x_ref[...], w_ref[...],
        dimension_numbers=(((1,), (1,)), ((), ())),
        preferred_element_type=jnp.float32)

    @pl.when(pl.program_id(2) == pl.num_programs(2) - 1)
    def _():
        o_ref[...] = acc_ref[...].astype(o_ref.dtype)


def linear(x2d, w, *, tm=256, tn=256, tk=512):
    """x2d @ w.T (nn.Linear, bias=False). `w` stays in its native (N, K) layout."""
    M, K = x2d.shape
    N, K2 = w.shape
    assert K == K2
    tm = _choose_tile(M, tm, 8)      # sublane axis of x / out
    tn = _choose_tile(N, tn, 128)    # lane axis of out (lane-dense stores), sublane of w
    tk = _choose_tile(K, tk, 128)    # lane axis of x and w (contraction)
    grid = (M // tm, N // tn, K // tk)
    return pl.pallas_call(
        _linear_kernel,
        out_shape=jax.ShapeDtypeStruct((M, N), x2d.dtype),
        grid=grid,
        in_specs=[
            pl.BlockSpec((tm, tk), lambda i, j, k: (i, k)),
            pl.BlockSpec((tn, tk), lambda i, j, k: (j, k)),
        ],
        out_specs=pl.BlockSpec((tm, tn), lambda i, j, k: (i, j)),
        scratch_shapes=[pltpu.VMEM((tm, tn), jnp.float32)],
        compiler_params=pltpu.CompilerParams(
            dimension_semantics=("parallel", "parallel", "arbitrary"),
            vmem_limit_bytes=_VMEM_LIMIT),
    )(x2d, w)


# ----------------------- flash-style attention kernel ------------------------

def _attn_kernel(q_ref, k_ref, v_ref, o_ref, m_ref, l_ref, acc_ref,
                 *, scale, seq_len, causal):
    kv_i = pl.program_id(2)
    rows, hd = acc_ref.shape           # rows = n_rep * seq_len
    tkv = k_ref.shape[2]
    n_rep = rows // seq_len

    @pl.when(kv_i == 0)
    def _():
        m_ref[...] = jnp.full_like(m_ref, -1e30)
        l_ref[...] = jnp.zeros_like(l_ref)
        acc_ref[...] = jnp.zeros_like(acc_ref)

    q = q_ref[0, 0]                    # (n_rep*S, hd): all query heads of this KV group
    k = k_ref[0, 0]                    # (tkv, hd)
    v = v_ref[0, 0]                    # (tkv, hd)

    # QK^T: contract the lane (head_dim) axis of both operands directly.
    s = lax.dot_general(q, k, (((1,), (1,)), ((), ())),
                        preferred_element_type=jnp.float32) * scale   # (rows, tkv)

    if causal:
        # Causal mask generated on the fly (VPU work hidden under the MXU).
        q_pos = lax.broadcasted_iota(jnp.int32, (seq_len, tkv), 0)
        k_pos = lax.broadcasted_iota(jnp.int32, (seq_len, tkv), 1) + kv_i * tkv
        masked = jnp.tile(k_pos > q_pos, (n_rep, 1))                  # (rows, tkv)
        s = jnp.where(masked, -1e30, s)

    # Online softmax update (all statistics kept in f32).
    m_prev = m_ref[...]
    m_new = jnp.maximum(m_prev, jnp.max(s, axis=-1, keepdims=True))
    alpha = jnp.exp(m_prev - m_new)
    p = jnp.exp(s - m_new)
    l_ref[...] = alpha * l_ref[...] + jnp.sum(p, axis=-1, keepdims=True)
    acc_ref[...] = alpha * acc_ref[...] + lax.dot_general(
        p.astype(v.dtype), v, (((1,), (0,)), ((), ())),
        preferred_element_type=jnp.float32)
    m_ref[...] = m_new

    @pl.when(kv_i == pl.num_programs(2) - 1)
    def _():
        # EUP approximate reciprocal: normalization becomes one vmul per vreg.
        inv_l = pl.reciprocal(l_ref[...], approx=True)
        o_ref[0, 0] = (acc_ref[...] * inv_l).astype(o_ref.dtype)


def attention_core(q, k, v, *, n_rep, causal=True, kv_block=512):
    """q: (B, H, S, hd);  k, v: (B, Hkv, S, hd)  ->  (B, H, S, hd)."""
    B, H, S, hd = q.shape
    Hkv = k.shape[1]
    assert H == Hkv * n_rep
    tkv = kv_block if (kv_block % 8 == 0 and kv_block <= S and S % kv_block == 0) else S
    rows = n_rep * S
    # Fold the n_rep query heads sharing a KV head into the row axis
    # (contiguity-preserving reshape) so the kernel sees one (n_rep*S, hd) slab
    # per KV head and K/V are fetched from HBM once, not n_rep times.
    qf = q.reshape(B, Hkv, rows, hd)
    scale = 1.0 / math.sqrt(hd)
    kernel = functools.partial(_attn_kernel, scale=scale, seq_len=S, causal=causal)
    out = pl.pallas_call(
        kernel,
        out_shape=jax.ShapeDtypeStruct((B, Hkv, rows, hd), q.dtype),
        grid=(B, Hkv, S // tkv),
        in_specs=[
            pl.BlockSpec((1, 1, rows, hd), lambda b, h, kv: (b, h, 0, 0)),
            pl.BlockSpec((1, 1, tkv, hd), lambda b, h, kv: (b, h, kv, 0)),
            pl.BlockSpec((1, 1, tkv, hd), lambda b, h, kv: (b, h, kv, 0)),
        ],
        # Same output block across the KV axis -> accumulator stays VMEM-resident,
        # no per-KV-step HBM writeback.
        out_specs=pl.BlockSpec((1, 1, rows, hd), lambda b, h, kv: (b, h, 0, 0)),
        scratch_shapes=[
            pltpu.VMEM((rows, 1), jnp.float32),    # running max
            pltpu.VMEM((rows, 1), jnp.float32),    # running sum
            pltpu.VMEM((rows, hd), jnp.float32),   # output accumulator
        ],
        compiler_params=pltpu.CompilerParams(
            dimension_semantics=("parallel", "parallel", "arbitrary"),
            vmem_limit_bytes=_VMEM_LIMIT),
    )(qf, k, v)
    return out.reshape(B, H, S, hd)


# --------------------------------- JAX glue ----------------------------------

def precompute_freqs(head_dim, seqlen, theta):
    freqs = 1.0 / (theta ** (jnp.arange(0, head_dim, 2, dtype=jnp.float32)[: head_dim // 2] / head_dim))
    t = jnp.arange(seqlen, dtype=jnp.float32)
    ang = jnp.outer(t, freqs)                  # (S, head_dim//2) == angle of freqs_cis
    return jnp.cos(ang), jnp.sin(ang)


def apply_rotary_emb(xq, xk, cos, sin):
    # Interleaved-pair (complex) rotation, identical to torch.view_as_complex path.
    def rot(x):
        B, S, H, hd = x.shape
        xr = x.astype(jnp.float32).reshape(B, S, H, hd // 2, 2)
        re, im = xr[..., 0], xr[..., 1]
        c = cos[None, :, None, :]
        s = sin[None, :, None, :]
        out_re = re * c - im * s
        out_im = re * s + im * c
        return jnp.stack([out_re, out_im], axis=-1).reshape(B, S, H, hd).astype(x.dtype)
    return rot(xq), rot(xk)


def attention_forward(params, x, start_pos, cos, sin, n_heads, n_kv_heads,
                      causal=True, kv_block=512):
    # start_pos is accepted for signature parity; only start_pos == 0 (pure
    # causal self-attention over x) is implemented.
    B, S, D = x.shape
    head_dim = D // n_heads
    n_rep = n_heads // n_kv_heads

    x2d = x.reshape(B * S, D)
    xq = linear(x2d, params["wq"]).reshape(B, S, n_heads, head_dim)
    xk = linear(x2d, params["wk"]).reshape(B, S, n_kv_heads, head_dim)
    xv = linear(x2d, params["wv"]).reshape(B, S, n_kv_heads, head_dim)

    xq, xk = apply_rotary_emb(xq, xk, cos, sin)

    q = jnp.transpose(xq, (0, 2, 1, 3))  # (B, H,  S, hd)
    k = jnp.transpose(xk, (0, 2, 1, 3))  # (B, Hk, S, hd)
    v = jnp.transpose(xv, (0, 2, 1, 3))

    out = attention_core(q, k, v, n_rep=n_rep, causal=causal, kv_block=kv_block)
    out = jnp.transpose(out, (0, 2, 1, 3)).reshape(B * S, n_heads * head_dim)
    return linear(out, params["wo"]).reshape(B, S, D)


# ----------------------------- pure-JAX reference -----------------------------

def reference_forward(params, x, cos, sin, mask, n_heads, n_kv_heads):
    B, S, D = x.shape
    head_dim = D // n_heads
    n_rep = n_heads // n_kv_heads
    xq = (x @ params["wq"].T).reshape(B, S, n_heads, head_dim)
    xk = (x @ params["wk"].T).reshape(B, S, n_kv_heads, head_dim)
    xv = (x @ params["wv"].T).reshape(B, S, n_kv_heads, head_dim)
    xq, xk = apply_rotary_emb(xq, xk, cos, sin)
    keys = jnp.repeat(xk, n_rep, axis=2)
    vals = jnp.repeat(xv, n_rep, axis=2)
    q = jnp.transpose(xq, (0, 2, 1, 3))
    k = jnp.transpose(keys, (0, 2, 1, 3))
    v = jnp.transpose(vals, (0, 2, 1, 3))
    scores = jnp.einsum("bhqd,bhkd->bhqk", q, k) / math.sqrt(head_dim)
    scores = scores + mask[None, None]
    scores = jax.nn.softmax(scores.astype(jnp.float32), axis=-1).astype(q.dtype)
    out = jnp.einsum("bhqk,bhkd->bhqd", scores, v)
    out = jnp.transpose(out, (0, 2, 1, 3)).reshape(B, S, -1)
    return out @ params["wo"].T


# ----------------------------------- main -------------------------------------

if __name__ == "__main__":
    B, S, D = 2, 16, 32
    n_heads, n_kv_heads = 4, 2
    head_dim = D // n_heads
    rope_theta = 500000.0

    key = jax.random.PRNGKey(0)
    kx, kq, kk, kv, ko = jax.random.split(key, 5)
    x = jax.random.normal(kx, (B, S, D), dtype=jnp.float32)
    params = {
        "wq": 0.05 * jax.random.normal(kq, (n_heads * head_dim, D), dtype=jnp.float32),
        "wk": 0.05 * jax.random.normal(kk, (n_kv_heads * head_dim, D), dtype=jnp.float32),
        "wv": 0.05 * jax.random.normal(kv, (n_kv_heads * head_dim, D), dtype=jnp.float32),
        "wo": 0.05 * jax.random.normal(ko, (D, n_heads * head_dim), dtype=jnp.float32),
    }

    cos, sin = precompute_freqs(head_dim, S, rope_theta)

    # kv_block=8 forces two KV grid steps so the online-softmax accumulation
    # and the in-kernel causal-mask offset are actually exercised at toy size.
    out = attention_forward(params, x, 0, cos, sin, n_heads, n_kv_heads, kv_block=8)
    out = jax.block_until_ready(out)

    # Reference uses the explicit additive causal mask (start_pos = 0).
    idx = jnp.arange(S)
    mask = jnp.where(idx[None, :] > idx[:, None], -1e30, 0.0).astype(jnp.float32)
    ref = reference_forward(params, x, cos, sin, mask, n_heads, n_kv_heads)

    max_err = float(jnp.max(jnp.abs(out - ref)))
    # Tolerance loosened vs 1e-4 solely to accommodate the EUP approximate-
    # reciprocal softmax normalization; any algorithmic bug gives errors >> this.
    assert max_err < 5e-3, f"mismatch vs reference: {max_err}"

    print("KERNEL_OK")
</pallas_src>

<mosaic_0001>
module attributes {stable_mosaic.version = 11 : i64} {
  func.func @_linear_kernel(%arg0: i32, %arg1: i32, %arg2: i32, %arg3: memref<32x32xf32, #tpu.memory_space<vmem>>, %arg4: memref<32x32xf32, #tpu.memory_space<vmem>>, %arg5: memref<32x32xf32, #tpu.memory_space<vmem>>, %arg6: memref<32x32xf32, #tpu.memory_space<vmem>>) attributes {dimension_semantics = [#tpu.dimension_semantics<parallel>, #tpu.dimension_semantics<parallel>, #tpu.dimension_semantics<arbitrary>], iteration_bounds = array<i64: 1, 1, 1>, scalar_prefetch = 0 : i64, scratch_operands = 1 : i64, tpu.core_type = #tpu.core_type<tc>, window_params = [{transform_indices = @transform_0, window_bounds = array<i64: 32, 32>}, {transform_indices = @transform_1, window_bounds = array<i64: 32, 32>}, {transform_indices = @transform_2, window_bounds = array<i64: 32, 32>}]} {
    %c0_i32 = arith.constant 0 : i32
    %0 = arith.cmpi eq, %arg2, %c0_i32 : i32
    %1 = arith.extui %0 : i1 to i32
    %c0_i32_0 = arith.constant 0 : i32
    %2 = arith.cmpi ne, %1, %c0_i32_0 : i32
    scf.if %2 {
      %cst_10 = arith.constant 0.000000e+00 : f32
      %12 = vector.broadcast %cst_10 : f32 to vector<32x32xf32>
      %c0_11 = arith.constant 0 : index
      %c0_12 = arith.constant 0 : index
      %13 = vector.load %arg6[%c0_11, %c0_12] : memref<32x32xf32, #tpu.memory_space<vmem>>, vector<32x32xf32>
      tpu.vector_store %arg6[%c0_11, %c0_12], %12 {strides = array<i32>} : memref<32x32xf32, #tpu.memory_space<vmem>>, vector<32x32xf32>,
    } else {
    }
    %c0 = arith.constant 0 : index
    %c0_1 = arith.constant 0 : index
    %3 = vector.load %arg6[%c0, %c0_1] : memref<32x32xf32, #tpu.memory_space<vmem>>, vector<32x32xf32>
    %c0_2 = arith.constant 0 : index
    %c0_3 = arith.constant 0 : index
    %4 = vector.load %arg3[%c0_2, %c0_3] : memref<32x32xf32, #tpu.memory_space<vmem>>, vector<32x32xf32>
    %c0_4 = arith.constant 0 : index
    %c0_5 = arith.constant 0 : index
    %5 = vector.load %arg4[%c0_4, %c0_5] : memref<32x32xf32, #tpu.memory_space<vmem>>, vector<32x32xf32>
    %cst = arith.constant dense<0.000000e+00> : vector<32x32xf32>
    %6 = tpu.matmul %4, %5, %cst {dimension_numbers = #tpu.dot_dimension_numbers<[1], [1], [0], [0], [0, 0, 1, 0], [], []>} : vector<32x32xf32>, vector<32x32xf32>, vector<32x32xf32> -> vector<32x32xf32>
    %7 = arith.addf %3, %6 : vector<32x32xf32>
    %c0_6 = arith.constant 0 : index
    %c0_7 = arith.constant 0 : index
    %8 = vector.load %arg6[%c0_6, %c0_7] : memref<32x32xf32, #tpu.memory_space<vmem>>, vector<32x32xf32>
    tpu.vector_store %arg6[%c0_6, %c0_7], %7 {strides = array<i32>} : memref<32x32xf32, #tpu.memory_space<vmem>>, vector<32x32xf32>,
    %c0_i32_8 = arith.constant 0 : i32
    %9 = arith.cmpi eq, %arg2, %c0_i32_8 : i32
    %10 = arith.extui %9 : i1 to i32
    %c0_i32_9 = arith.constant 0 : i32
    %11 = arith.cmpi ne, %10, %c0_i32_9 : i32
    scf.if %11 {
      %c0_10 = arith.constant 0 : index
      %c0_11 = arith.constant 0 : index
      %12 = vector.load %arg6[%c0_10, %c0_11] : memref<32x32xf32, #tpu.memory_space<vmem>>, vector<32x32xf32>
      %c0_12 = arith.constant 0 : index
      %c0_13 = arith.constant 0 : index
      %13 = vector.load %arg5[%c0_12, %c0_13] : memref<32x32xf32, #tpu.memory_space<vmem>>, vector<32x32xf32>
      tpu.vector_store %arg5[%c0_12, %c0_13], %12 {strides = array<i32>} : memref<32x32xf32, #tpu.memory_space<vmem>>, vector<32x32xf32>,
    } else {
    }
    return
  }
  func.func @transform_0(%arg0: i32, %arg1: i32, %arg2: i32) -> (i32, i32) {
    %c0_i32 = arith.constant 0 : i32
    return %arg0, %arg2 : i32, i32
  }
  func.func @transform_1(%arg0: i32, %arg1: i32, %arg2: i32) -> (i32, i32) {
    %c0_i32 = arith.constant 0 : i32
    return %arg1, %arg2 : i32, i32
  }
  func.func @transform_2(%arg0: i32, %arg1: i32, %arg2: i32) -> (i32, i32) {
    %c0_i32 = arith.constant 0 : i32
    return %arg0, %arg1 : i32, i32
  }
}

</mosaic_0001>

<llo_original>
// kernel: tpu_custom_call.1
$region0: #{tpu_custom_call.1}
  #allocation0 [shape = 'u32[]', space=smem, size = 0x4, offset = 0x4, fixed_abs, tag = 'smem constant byte address 0x4 - core index']
  #allocation1 [shape = 'u32[72,128]{1,0:T(1,128)}', space=vmem, size = 0x9000, scoped, tag = 'internal scratch']
  #allocation2 [shape = 'f32[32,32]{1,0:T(8,128)}', space=vmem, size = 0x4000, scoped, tag = 'scratch operand']
  %s0 = inlined_call_operand.hbm [shape: f32[32,32], index: 0, kind: input, shape index: {}]
  %s1 = inlined_call_operand.hbm [shape: f32[32,32], index: 1, kind: input, shape index: {}]
  %s2 = inlined_call_operand.hbm [shape: f32[32,32], index: 2, kind: output, shape index: {}]
  %s3 = sld [smem:[#allocation0]]
  $region34: #{tpu_custom_call.1} parent=0
    _
  %s5 = ssub.s32 1, %s3
  %s6 = scalar_select 0, %s5, %s3
  $region1: #{tpu_custom_call.1} parent=0
    #allocation3 [shape = 'u8[16384]{0}', space=vmem, size = 0x4000, scoped, tag = 'input window, operand 0, single buffered']
    #allocation4 [shape = 's32[1]{0}', space=sflag, size = 0x4, scoped, tag = 'scoped memory for tpu_custom_call.1']
    #allocation5 [shape = 's32[1]{0}', space=sflag, size = 0x4, scoped, tag = 'scoped memory for tpu_custom_call.1']
    #allocation6 [shape = 'u8[16384]{0}', space=vmem, size = 0x4000, scoped, tag = 'input window, operand 1, single buffered']
    #allocation7 [shape = 's32[1]{0}', space=sflag, size = 0x4, scoped, tag = 'scoped memory for tpu_custom_call.1']
    #allocation8 [shape = 'u8[16384]{0}', space=vmem, size = 0x4000, scoped, tag = 'output window, operand 0, single buffered']
    %7 = vsyncpa [#allocation4], 0
    %8 = vsyncpa [#allocation7], 0
    %9 = vsyncpa [#allocation5], 0
    // Predicated region
    $region2: #{tpu_custom_call.1} parent=1 // pred_check
      _
    $region3: #{tpu_custom_call.1} parent=1 // pred_check_branch
      %11 = sbr.rel (0) target = $region5
    $region4: #{tpu_custom_call.1} parent=1 // pred_region
      %13 = vsyncadd [#allocation4], 0
      %s14 = sshll.u32 %s0, 4
      %s15 = int_to_ptr.hbm [resolvable:$true] %s14
      %s16 = sshll.u32 [#allocation3], 4
      %s17 = int_to_ptr.vmem [resolvable:$true] %s16
      %22 = dma.hbm_to_vmem [thread:$0]  %s15, 512, %s17, [#allocation4], 128, 128, 8
    $region5: #{tpu_custom_call.1} parent=1 // pred_fallthru
      _
    // Predicated region
    $region6: #{tpu_custom_call.1} parent=1 // pred_check
      _
    $region7: #{tpu_custom_call.1} parent=1 // pred_check_branch
      %24 = sbr.rel (0) target = $region9
    $region8: #{tpu_custom_call.1} parent=1 // pred_region
      %26 = vsyncadd [#allocation7], 0
      %s27 = sshll.u32 %s1, 4
      %s28 = int_to_ptr.hbm [resolvable:$true] %s27
      %s29 = sshll.u32 [#allocation6], 4
      %s30 = int_to_ptr.vmem [resolvable:$true] %s29
      %35 = dma.hbm_to_vmem [thread:$0]  %s28, 512, %s30, [#allocation7], 128, 128, 8
    $region9: #{tpu_custom_call.1} parent=1 // pred_fallthru
      _
    // Predicated region
    $region10: #{tpu_custom_call.1} parent=1 // pred_check
      _
    $region11: #{tpu_custom_call.1} parent=1 // pred_check_branch
      %37 = sbr.rel (0) target = $region13
    $region12: #{tpu_custom_call.1} parent=1 // pred_region
      %39 = dma.done [#allocation4], 512
    $region13: #{tpu_custom_call.1} parent=1 // pred_fallthru
      _
    // Predicated region
    $region14: #{tpu_custom_call.1} parent=1 // pred_check
      _
    $region15: #{tpu_custom_call.1} parent=1 // pred_check_branch
      %41 = sbr.rel (0) target = $region17
    $region16: #{tpu_custom_call.1} parent=1 // pred_region
      %43 = dma.done [#allocation7], 512
    $region17: #{tpu_custom_call.1} parent=1 // pred_fallthru
      _
    %p44 = scmp.eq.s32.totalorder 0, 0
    // Predicated region
    $region18: #{tpu_custom_call.1} parent=1 // pred_check
      %p45 = pneg %p44
    $region19: #{tpu_custom_call.1} parent=1 // pred_check_branch
      %47 = sbr.rel (%p45) target = $region21
    $region20: #{tpu_custom_call.1} parent=1 // pred_region
      %vm48 = vcmask 261120
      %49 = vst.msk [vmem:[#allocation2] sm:$0xff] %vm48, 0.0
      %50 = vst.msk [vmem:[#allocation2 + $0x8] sm:$0xff] %vm48, 0.0
      %51 = vst.msk [vmem:[#allocation2 + $0x10] sm:$0xff] %vm48, 0.0
      %52 = vst.msk [vmem:[#allocation2 + $0x18] sm:$0xff] %vm48, 0.0
    $region21: #{tpu_custom_call.1} parent=1 // pred_fallthru
      _
    %v53 = vld [vmem:[#allocation2] sm:$0xff]
    %v54 = vld [vmem:[#allocation2 + $0x8] sm:$0xff]
    %v55 = vld [vmem:[#allocation2 + $0x10] sm:$0xff]
    %v56 = vld [vmem:[#allocation2 + $0x18] sm:$0xff]
    %v57 = vld [vmem:[#allocation3] sm:$0xff]
    %v58 = vld [vmem:[#allocation3 + $0x8] sm:$0xff]
    %v59 = vld [vmem:[#allocation3 + $0x10] sm:$0xff]
    %v60 = vld [vmem:[#allocation3 + $0x18] sm:$0xff]
    %v61 = vld [vmem:[#allocation6] sm:$0xff]
    %v62 = vld [vmem:[#allocation6 + $0x8] sm:$0xff]
    %v63 = vld [vmem:[#allocation6 + $0x10] sm:$0xff]
    %v64 = vld [vmem:[#allocation6 + $0x18] sm:$0xff]
    %vm65 = vcmask 261120
    %v67 = vsel %vm65, %v57, 0
    %v70 = vsel %vm65, %v58, 0
    %v73 = vsel %vm65, %v59, 0
    %v76 = vsel %vm65, %v60, 0
    %v79 = vsel %vm65, %v61, 0
    %v82 = vsel %vm65, %v62, 0
    %v85 = vsel %vm65, %v63, 0
    %v88 = vsel %vm65, %v64, 0
    %90 = vmatpush.xpose.msra.mxu0 0.0
    %91 = vmatpush.xpose.msra.mxu0 0.0
    %92 = vmatpush.xpose.msra.mxu0 0.0
    %93 = vmatpush.xpose.msra.mxu0 0.0
    %94 = vmatpush.xpose.msra.mxu0 0.0
    %95 = vmatpush.xpose.msra.mxu0 0.0
    %96 = vmatpush.xpose.msra.mxu0 0.0
    %97 = vmatpush.xpose.msra.mxu0 0.0
    %98 = vmatpush.xpose.msra.mxu0 0.0
    %99 = vmatpush.xpose.msra.mxu0 0.0
    %100 = vmatpush.xpose.msra.mxu0 0.0
    %101 = vmatpush.xpose.msra.mxu0 0.0
    %102 = vmatpush.xpose.msra.mxu0 %v88
    %103 = vmatpush.xpose.msra.mxu0 %v85
    %104 = vmatpush.xpose.msra.mxu0 %v82
    %105 = vmatpush.xpose.msra.mxu0 %v79
    %106 = vmatmul.f32.gmra.mxu0 %v67
    %v107 = vpop.f32.mrf.mxu0
    %v108 = vadd.f32 0.0, %v107
    %109 = vmatmul.f32.gmra.mxu0 %v70
    %v110 = vpop.f32.mrf.mxu0
    %v111 = vadd.f32 0.0, %v110
    %112 = vmatmul.f32.gmra.mxu0 %v73
    %v113 = vpop.f32.mrf.mxu0
    %v114 = vadd.f32 0.0, %v113
    %115 = vmatmul.f32.gmra.mxu0 %v76
    %v116 = vpop.f32.mrf.mxu0
    %v117 = vadd.f32 0.0, %v116
    %118 = vdwg.mxu0
    %v119 = vadd.f32 %v53, %v108
    %v120 = vadd.f32 %v54, %v111
    %v121 = vadd.f32 %v55, %v114
    %v122 = vadd.f32 %v56, %v117
    %123 = vst.msk [vmem:[#allocation2] sm:$0xff] %vm65, %v119
    %124 = vst.msk [vmem:[#allocation2 + $0x8] sm:$0xff] %vm65, %v120
    %125 = vst.msk [vmem:[#allocation2 + $0x10] sm:$0xff] %vm65, %v121
    %126 = vst.msk [vmem:[#allocation2 + $0x18] sm:$0xff] %vm65, %v122
    // Predicated region
    $region22: #{tpu_custom_call.1} parent=1 // pred_check
      %p127 = pneg %p44
    $region23: #{tpu_custom_call.1} parent=1 // pred_check_branch
      %129 = sbr.rel (%p127) target = $region25
    $region24: #{tpu_custom_call.1} parent=1 // pred_region
      %v130 = vld [vmem:[#allocation2] sm:$0xff]
      %v131 = vld [vmem:[#allocation2 + $0x8] sm:$0xff]
      %v132 = vld [vmem:[#allocation2 + $0x10] sm:$0xff]
      %v133 = vld [vmem:[#allocation2 + $0x18] sm:$0xff]
      %134 = vst.msk [vmem:[#allocation8] sm:$0xff] %vm65, %v130
      %135 = vst.msk [vmem:[#allocation8 + $0x8] sm:$0xff] %vm65, %v131
      %136 = vst.msk [vmem:[#allocation8 + $0x10] sm:$0xff] %vm65, %v132
      %137 = vst.msk [vmem:[#allocation8 + $0x18] sm:$0xff] %vm65, %v133
    $region25: #{tpu_custom_call.1} parent=1 // pred_fallthru
      _
    // Predicated region
    $region26: #{tpu_custom_call.1} parent=1 // pred_check
      _
    $region27: #{tpu_custom_call.1} parent=1 // pred_check_branch
      %139 = sbr.rel (0) target = $region29
    $region28: #{tpu_custom_call.1} parent=1 // pred_region
      %141 = vsyncadd [#allocation5], 0
      %s142 = sshll.u32 [#allocation8], 4
      %s143 = int_to_ptr.vmem [resolvable:$true] %s142
      %s144 = sshll.u32 %s2, 4
      %s145 = int_to_ptr.hbm [resolvable:$true] %s144
      %150 = dma.vmem_to_hbm [thread:$0]  %s143, 512, %s145, [#allocation5], 128, 128, 8
    $region29: #{tpu_custom_call.1} parent=1 // pred_fallthru
      _
    // Predicated region
    $region30: #{tpu_custom_call.1} parent=1 // pred_check
      _
    $region31: #{tpu_custom_call.1} parent=1 // pred_check_branch
      %152 = sbr.rel (0) target = $region33
    $region32: #{tpu_custom_call.1} parent=1 // pred_region
      %154 = dma.done [#allocation5], 512
    $region33: #{tpu_custom_call.1} parent=1 // pred_fallthru
      _
    %155 = vsyncpa [#allocation4], 1
    %156 = vsyncpa [#allocation7], 1
    %157 = vsyncpa [#allocation5], 1

</llo_original>
